<compile_context>
chip_gen: v5e
topology: v5e:2x2
jax: 0.10.0
libtpu: 0.0.40
codegen_flags: <defaults>
</compile_context>

<pallas_src>
import jax
import jax.numpy as jnp
from jax.experimental import pallas as pl
from jax.experimental.pallas import tpu as pltpu


def _dice_partial_kernel(p_ref, t_ref, acc_ref):
    """Accumulate [intersection, sum(p), sum(t)] into a (3, 8, 128) block."""
    i = pl.program_id(0)  # reduction ("arbitrary") axis

    # Zero the resident accumulator block on the first grid step.
    @pl.when(i == 0)
    def _():
        acc_ref[...] = jnp.zeros_like(acc_ref)

    # Cast in-kernel (inputs arrive in their native dtype; bool was narrowed
    # to int8 in the wrapper, never widened to f32 in HBM).
    x = p_ref[...].astype(jnp.float32)
    t = t_ref[...].astype(jnp.float32)

    # sigmoid(x) == 0.5 * tanh(0.5 * x) + 0.5 : one EUP op per vreg instead
    # of exp + divide, keeping the kernel memory-bound on v7x.
    p = 0.5 * jnp.tanh(0.5 * x) + 0.5

    # (block_rows, 128) -> (block_rows//8, 8, 128): reduce only the leading
    # (non-tiled) axis per step -> pure VPU adds, no per-step XLU reduction.
    r = p.shape[0] // 8
    p3 = p.reshape(r, 8, 128)
    t3 = t.reshape(r, 8, 128)

    acc_ref[0:1, :, :] += jnp.sum(p3 * t3, axis=0, keepdims=True)
    acc_ref[1:2, :, :] += jnp.sum(p3, axis=0, keepdims=True)
    acc_ref[2:3, :, :] += jnp.sum(t3, axis=0, keepdims=True)


def _row_multiple(dtype):
    """Sublane multiple required by the packed tile shape of `dtype`."""
    itemsize = jnp.dtype(dtype).itemsize
    return max(8, 32 // max(itemsize, 1))  # f32 -> 8, bf16 -> 16, int8 -> 32


def _partial_sums(p2, t2, br, vmem_limit_bytes):
    """Run the streaming-reduction kernel over a (R, 128) pair; R % br == 0."""
    nb = p2.shape[0] // br
    return pl.pallas_call(
        _dice_partial_kernel,
        out_shape=jax.ShapeDtypeStruct((3, 8, 128), jnp.float32),
        grid_spec=pltpu.PrefetchScalarGridSpec(
            num_scalar_prefetch=0,
            grid=(nb,),
            in_specs=[
                pl.BlockSpec((br, 128), lambda i: (i, 0)),
                pl.BlockSpec((br, 128), lambda i: (i, 0)),
            ],
            out_specs=pl.BlockSpec((3, 8, 128), lambda i: (0, 0, 0)),
        ),
        compiler_params=pltpu.CompilerParams(
            dimension_semantics=("arbitrary",),
            vmem_limit_bytes=vmem_limit_bytes,
        ),
    )(p2, t2)


def dice_loss(preds, targets, smooth=1e-6, block_rows=8192):
    """Pallas TPU implementation of DiceLoss.forward."""
    p = preds.reshape(-1)
    t = targets.reshape(-1)
    # Keep boolean masks narrow (1 B/elem) instead of widening to f32 in HBM;
    # the kernel widens to f32 for free while the next DMA is in flight.
    if p.dtype == jnp.bool_:
        p = p.astype(jnp.int8)
    if t.dtype == jnp.bool_:
        t = t.astype(jnp.int8)
    n = p.shape[0]

    row_mult = max(_row_multiple(p.dtype), _row_multiple(t.dtype))
    rows = n // 128
    rows_aligned = (rows // row_mult) * row_mult

    vmem_limit_bytes = 48 * 1024 * 1024  # covers 2 in x 2 buf x 4 MiB + temps

    inter = jnp.zeros((), jnp.float32)
    sp = jnp.zeros((), jnp.float32)
    st = jnp.zeros((), jnp.float32)

    covered = 0
    if rows_aligned > 0:
        # Main pass: as many full big blocks as possible.
        br = min(block_rows, rows_aligned)
        br = max((br // row_mult) * row_mult, row_mult)
        nb = rows_aligned // br
        main_rows = nb * br
        p2 = p[: main_rows * 128].reshape(main_rows, 128)
        t2 = t[: main_rows * 128].reshape(main_rows, 128)
        acc = _partial_sums(p2, t2, br, vmem_limit_bytes)
        inter = inter + jnp.sum(acc[0])
        sp = sp + jnp.sum(acc[1])
        st = st + jnp.sum(acc[2])
        covered = main_rows * 128

        # Remaining full (row_mult, 128) row-groups: one more single-step
        # pallas_call instead of an un-pipelined multi-MiB jnp tail.
        rem_rows = rows_aligned - main_rows
        if rem_rows > 0:
            p3 = p[covered:covered + rem_rows * 128].reshape(rem_rows, 128)
            t3 = t[covered:covered + rem_rows * 128].reshape(rem_rows, 128)
            acc2 = _partial_sums(p3, t3, rem_rows, vmem_limit_bytes)
            inter = inter + jnp.sum(acc2[0])
            sp = sp + jnp.sum(acc2[1])
            st = st + jnp.sum(acc2[2])
            covered += rem_rows * 128

    if covered < n:
        # Tiny remainder (< row_mult*128 + 128 elements): plain jnp.
        p_tail = jax.nn.sigmoid(p[covered:].astype(jnp.float32))
        t_tail = t[covered:].astype(jnp.float32)
        inter = inter + jnp.sum(p_tail * t_tail)
        sp = sp + jnp.sum(p_tail)
        st = st + jnp.sum(t_tail)

    dice = (2.0 * inter + smooth) / (sp + st + smooth)
    return 1.0 - dice


def dice_loss_ref(preds, targets, smooth=1e-6):
    p = jax.nn.sigmoid(preds.astype(jnp.float32)).reshape(-1)
    t = targets.astype(jnp.float32).reshape(-1)
    intersection = jnp.sum(p * t)
    dice = (2.0 * intersection + smooth) / (jnp.sum(p) + jnp.sum(t) + smooth)
    return 1.0 - dice


if __name__ == "__main__":
    key = jax.random.PRNGKey(0)
    k1, k2, k3, k4, k5, k6 = jax.random.split(key, 6)

    # Small shapes consistent with a segmentation use-case: (B, C, H, W).
    preds = jax.random.normal(k1, (2, 4, 16, 16), dtype=jnp.float32)
    targets = (
        jax.random.uniform(k2, (2, 4, 16, 16), dtype=jnp.float32) > 0.5
    ).astype(jnp.float32)

    # 1) main path (single big block covers everything)
    loss = jax.block_until_ready(dice_loss(preds, targets))
    ref = dice_loss_ref(preds, targets)
    assert jnp.allclose(loss, ref, atol=1e-5, rtol=1e-5), (loss, ref)

    # 2) multi-step accumulation path (small block_rows -> several grid steps)
    loss2 = jax.block_until_ready(dice_loss(preds, targets, block_rows=8))
    assert jnp.allclose(loss2, ref, atol=1e-5, rtol=1e-5), (loss2, ref)

    # 3) remainder-block path (rows=24 with block_rows=16 -> 1 big + 1 small
    #    pallas_call, no jnp tail)
    preds3 = jax.random.normal(k3, (2, 4, 16, 24), dtype=jnp.float32)
    targets3 = (
        jax.random.uniform(k4, (2, 4, 16, 24), dtype=jnp.float32) > 0.5
    ).astype(jnp.float32)
    loss3 = jax.block_until_ready(dice_loss(preds3, targets3, block_rows=16))
    ref3 = dice_loss_ref(preds3, targets3)
    assert jnp.allclose(loss3, ref3, atol=1e-5, rtol=1e-5), (loss3, ref3)

    # 4) odd shape exercising the tiny jnp tail (no padding anywhere)
    preds4 = jax.random.normal(k5, (2, 3, 17, 19), dtype=jnp.float32)
    targets4 = (
        jax.random.uniform(k6, (2, 3, 17, 19), dtype=jnp.float32) > 0.5
    ).astype(jnp.float32)
    loss4 = jax.block_until_ready(dice_loss(preds4, targets4))
    ref4 = dice_loss_ref(preds4, targets4)
    assert jnp.allclose(loss4, ref4, atol=1e-5, rtol=1e-5), (loss4, ref4)

    # 5) boolean-mask targets: streamed as int8 (not widened to f32 in HBM)
    preds5 = jax.random.normal(k1, (2, 4, 32, 16), dtype=jnp.float32)
    targets5 = jax.random.uniform(k2, (2, 4, 32, 16), dtype=jnp.float32) > 0.5
    loss5 = jax.block_until_ready(dice_loss(preds5, targets5))
    ref5 = dice_loss_ref(preds5, targets5)
    assert jnp.allclose(loss5, ref5, atol=1e-5, rtol=1e-5), (loss5, ref5)

    print("KERNEL_OK")
</pallas_src>

<mosaic_0001>
module attributes {stable_mosaic.version = 11 : i64} {
  func.func @_dice_partial_kernel(%arg0: i32, %arg1: memref<16x128xf32, #tpu.memory_space<vmem>>, %arg2: memref<16x128xf32, #tpu.memory_space<vmem>>, %arg3: memref<3x8x128xf32, #tpu.memory_space<vmem>>) attributes {dimension_semantics = [#tpu.dimension_semantics<arbitrary>], iteration_bounds = array<i64: 1>, scalar_prefetch = 0 : i64, scratch_operands = 0 : i64, tpu.core_type = #tpu.core_type<tc>, window_params = [{transform_indices = @transform_0, window_bounds = array<i64: 16, 128>}, {transform_indices = @transform_1, window_bounds = array<i64: 16, 128>}, {pipeline_mode = #tpu.pipeline_mode<synchronous>, transform_indices = @transform_2, window_bounds = array<i64: 3, 8, 128>}]} {
    %c0_i32 = arith.constant 0 : i32
    %0 = arith.cmpi eq, %arg0, %c0_i32 : i32
    %1 = arith.extui %0 : i1 to i32
    %c0_i32_0 = arith.constant 0 : i32
    %2 = arith.cmpi ne, %1, %c0_i32_0 : i32
    scf.if %2 {
      %cst_25 = arith.constant 0.000000e+00 : f32
      %30 = vector.broadcast %cst_25 : f32 to vector<3x8x128xf32>
      %c0_26 = arith.constant 0 : index
      %c0_27 = arith.constant 0 : index
      %c0_28 = arith.constant 0 : index
      %31 = vector.load %arg3[%c0_26, %c0_27, %c0_28] : memref<3x8x128xf32, #tpu.memory_space<vmem>>, vector<3x8x128xf32>
      tpu.vector_store %arg3[%c0_26, %c0_27, %c0_28], %30 {strides = array<i32>} : memref<3x8x128xf32, #tpu.memory_space<vmem>>, vector<3x8x128xf32>,
    } else {
    }
    %c0 = arith.constant 0 : index
    %c0_1 = arith.constant 0 : index
    %3 = vector.load %arg1[%c0, %c0_1] : memref<16x128xf32, #tpu.memory_space<vmem>>, vector<16x128xf32>
    %c0_2 = arith.constant 0 : index
    %c0_3 = arith.constant 0 : index
    %4 = vector.load %arg2[%c0_2, %c0_3] : memref<16x128xf32, #tpu.memory_space<vmem>>, vector<16x128xf32>
    %cst = arith.constant 5.000000e-01 : f32
    %5 = vector.broadcast %cst : f32 to vector<16x128xf32>
    %6 = arith.mulf %5, %3 : vector<16x128xf32>
    %7 = math.tanh %6 : vector<16x128xf32>
    %cst_4 = arith.constant 5.000000e-01 : f32
    %8 = vector.broadcast %cst_4 : f32 to vector<16x128xf32>
    %9 = arith.mulf %8, %7 : vector<16x128xf32>
    %cst_5 = arith.constant 5.000000e-01 : f32
    %10 = vector.broadcast %cst_5 : f32 to vector<16x128xf32>
    %11 = arith.addf %9, %10 : vector<16x128xf32>
    %12 = vector.shape_cast %11 : vector<16x128xf32> to vector<2x8x128xf32>
    %13 = vector.shape_cast %4 : vector<16x128xf32> to vector<2x8x128xf32>
    %c0_6 = arith.constant 0 : index
    %c0_7 = arith.constant 0 : index
    %c0_8 = arith.constant 0 : index
    %14 = vector.load %arg3[%c0_6, %c0_7, %c0_8] : memref<3x8x128xf32, #tpu.memory_space<vmem>>, vector<1x8x128xf32>
    %15 = arith.mulf %12, %13 : vector<2x8x128xf32>
    %cst_9 = arith.constant dense<0.000000e+00> : vector<8x128xf32>
    %16 = vector.multi_reduction <add>, %15, %cst_9 [0] : vector<2x8x128xf32> to vector<8x128xf32>
    %17 = vector.shape_cast %16 : vector<8x128xf32> to vector<1x8x128xf32>
    %18 = arith.addf %14, %17 : vector<1x8x128xf32>
    %c0_10 = arith.constant 0 : index
    %c0_11 = arith.constant 0 : index
    %c0_12 = arith.constant 0 : index
    %19 = vector.load %arg3[%c0_10, %c0_11, %c0_12] : memref<3x8x128xf32, #tpu.memory_space<vmem>>, vector<1x8x128xf32>
    tpu.vector_store %arg3[%c0_10, %c0_11, %c0_12], %18 {strides = array<i32>} : memref<3x8x128xf32, #tpu.memory_space<vmem>>, vector<1x8x128xf32>,
    %c1 = arith.constant 1 : index
    %c0_13 = arith.constant 0 : index
    %c0_14 = arith.constant 0 : index
    %20 = vector.load %arg3[%c1, %c0_13, %c0_14] : memref<3x8x128xf32, #tpu.memory_space<vmem>>, vector<1x8x128xf32>
    %cst_15 = arith.constant dense<0.000000e+00> : vector<8x128xf32>
    %21 = vector.multi_reduction <add>, %12, %cst_15 [0] : vector<2x8x128xf32> to vector<8x128xf32>
    %22 = vector.shape_cast %21 : vector<8x128xf32> to vector<1x8x128xf32>
    %23 = arith.addf %20, %22 : vector<1x8x128xf32>
    %c1_16 = arith.constant 1 : index
    %c0_17 = arith.constant 0 : index
    %c0_18 = arith.constant 0 : index
    %24 = vector.load %arg3[%c1_16, %c0_17, %c0_18] : memref<3x8x128xf32, #tpu.memory_space<vmem>>, vector<1x8x128xf32>
    tpu.vector_store %arg3[%c1_16, %c0_17, %c0_18], %23 {strides = array<i32>} : memref<3x8x128xf32, #tpu.memory_space<vmem>>, vector<1x8x128xf32>,
    %c2 = arith.constant 2 : index
    %c0_19 = arith.constant 0 : index
    %c0_20 = arith.constant 0 : index
    %25 = vector.load %arg3[%c2, %c0_19, %c0_20] : memref<3x8x128xf32, #tpu.memory_space<vmem>>, vector<1x8x128xf32>
    %cst_21 = arith.constant dense<0.000000e+00> : vector<8x128xf32>
    %26 = vector.multi_reduction <add>, %13, %cst_21 [0] : vector<2x8x128xf32> to vector<8x128xf32>
    %27 = vector.shape_cast %26 : vector<8x128xf32> to vector<1x8x128xf32>
    %28 = arith.addf %25, %27 : vector<1x8x128xf32>
    %c2_22 = arith.constant 2 : index
    %c0_23 = arith.constant 0 : index
    %c0_24 = arith.constant 0 : index
    %29 = vector.load %arg3[%c2_22, %c0_23, %c0_24] : memref<3x8x128xf32, #tpu.memory_space<vmem>>, vector<1x8x128xf32>
    tpu.vector_store %arg3[%c2_22, %c0_23, %c0_24], %28 {strides = array<i32>} : memref<3x8x128xf32, #tpu.memory_space<vmem>>, vector<1x8x128xf32>,
    return
  }
  func.func @transform_0(%arg0: i32) -> (i32, i32) {
    %c0_i32 = arith.constant 0 : i32
    %c0_i32_0 = arith.constant 0 : i32
    return %arg0, %c0_i32 : i32, i32
  }
  func.func @transform_1(%arg0: i32) -> (i32, i32) {
    %c0_i32 = arith.constant 0 : i32
    %c0_i32_0 = arith.constant 0 : i32
    return %arg0, %c0_i32 : i32, i32
  }
  func.func @transform_2(%arg0: i32) -> (i32, i32, i32) {
    %c0_i32 = arith.constant 0 : i32
    %c0_i32_0 = arith.constant 0 : i32
    %c0_i32_1 = arith.constant 0 : i32
    %c0_i32_2 = arith.constant 0 : i32
    return %c0_i32, %c0_i32_0, %c0_i32_1 : i32, i32, i32
  }
}

</mosaic_0001>

<llo_original>
// kernel: tpu_custom_call.1
$region0: #{tpu_custom_call.1}
  #allocation0 [shape = 'u32[]', space=smem, size = 0x4, offset = 0x4, fixed_abs, tag = 'smem constant byte address 0x4 - core index']
  #allocation1 [shape = 'u32[72,128]{1,0:T(1,128)}', space=vmem, size = 0x9000, scoped, tag = 'internal scratch']
  %s0 = inlined_call_operand.hbm [shape: f32[16,128], index: 0, kind: input, shape index: {}]
  %s1 = inlined_call_operand.hbm [shape: f32[16,128], index: 1, kind: input, shape index: {}]
  %s2 = inlined_call_operand.hbm [shape: f32[3,8,128], index: 2, kind: output, shape index: {}]
  %s3 = sld [smem:[#allocation0]]
  $region30: #{tpu_custom_call.1} parent=0
    _
  %s5 = ssub.s32 1, %s3
  %s6 = scalar_select 0, %s5, %s3
  $region1: #{tpu_custom_call.1} parent=0
    #allocation2 [shape = 'u8[8192]{0}', space=vmem, size = 0x2000, scoped, tag = 'input window, operand 0, single buffered']
    #allocation3 [shape = 's32[1]{0}', space=sflag, size = 0x4, scoped, tag = 'scoped memory for tpu_custom_call.1']
    #allocation4 [shape = 's32[1]{0}', space=sflag, size = 0x4, scoped, tag = 'scoped memory for tpu_custom_call.1']
    #allocation5 [shape = 'u8[8192]{0}', space=vmem, size = 0x2000, scoped, tag = 'input window, operand 1, single buffered']
    #allocation6 [shape = 's32[1]{0}', space=sflag, size = 0x4, scoped, tag = 'scoped memory for tpu_custom_call.1']
    #allocation7 [shape = 'u8[12288]{0}', space=vmem, size = 0x3000, scoped, tag = 'output window, operand 0, single buffered']
    %7 = vsyncpa [#allocation3], 0
    %8 = vsyncpa [#allocation6], 0
    %9 = vsyncpa [#allocation4], 0
    // Predicated region
    $region2: #{tpu_custom_call.1} parent=1 // pred_check
      _
    $region3: #{tpu_custom_call.1} parent=1 // pred_check_branch
      %11 = sbr.rel (0) target = $region5
    $region4: #{tpu_custom_call.1} parent=1 // pred_region
      %13 = vsyncadd [#allocation3], 0
      %s14 = sshll.u32 %s0, 4
      %s15 = int_to_ptr.hbm [resolvable:$true] %s14
      %s16 = sshll.u32 [#allocation2], 4
      %s17 = int_to_ptr.vmem [resolvable:$true] %s16
      %22 = dma.hbm_to_vmem [thread:$0]  %s15, 256, %s17, [#allocation3], 128, 128, 8
    $region5: #{tpu_custom_call.1} parent=1 // pred_fallthru
      _
    // Predicated region
    $region6: #{tpu_custom_call.1} parent=1 // pred_check
      _
    $region7: #{tpu_custom_call.1} parent=1 // pred_check_branch
      %24 = sbr.rel (0) target = $region9
    $region8: #{tpu_custom_call.1} parent=1 // pred_region
      %26 = vsyncadd [#allocation6], 0
      %s27 = sshll.u32 %s1, 4
      %s28 = int_to_ptr.hbm [resolvable:$true] %s27
      %s29 = sshll.u32 [#allocation5], 4
      %s30 = int_to_ptr.vmem [resolvable:$true] %s29
      %35 = dma.hbm_to_vmem [thread:$0]  %s28, 256, %s30, [#allocation6], 128, 128, 8
    $region9: #{tpu_custom_call.1} parent=1 // pred_fallthru
      _
    // Predicated region
    $region10: #{tpu_custom_call.1} parent=1 // pred_check
      _
    $region11: #{tpu_custom_call.1} parent=1 // pred_check_branch
      %37 = sbr.rel (0) target = $region13
    $region12: #{tpu_custom_call.1} parent=1 // pred_region
      %39 = dma.done [#allocation3], 256
    $region13: #{tpu_custom_call.1} parent=1 // pred_fallthru
      _
    // Predicated region
    $region14: #{tpu_custom_call.1} parent=1 // pred_check
      _
    $region15: #{tpu_custom_call.1} parent=1 // pred_check_branch
      %41 = sbr.rel (0) target = $region17
    $region16: #{tpu_custom_call.1} parent=1 // pred_region
      %43 = dma.done [#allocation6], 256
    $region17: #{tpu_custom_call.1} parent=1 // pred_fallthru
      _
    %p44 = scmp.eq.s32.totalorder 0, 0
    // Predicated region
    $region18: #{tpu_custom_call.1} parent=1 // pred_check
      %p45 = pneg %p44
    $region19: #{tpu_custom_call.1} parent=1 // pred_check_branch
      %47 = sbr.rel (%p45) target = $region21
    $region20: #{tpu_custom_call.1} parent=1 // pred_region
      %48 = vst [vmem:[#allocation7] sm:$0xff] 0.0
      %49 = vst [vmem:[#allocation7 + $0x8] sm:$0xff] 0.0
      %50 = vst [vmem:[#allocation7 + $0x10] sm:$0xff] 0.0
    $region21: #{tpu_custom_call.1} parent=1 // pred_fallthru
      _
    %v51 = vld [vmem:[#allocation2] sm:$0xff]
    %v52 = vld [vmem:[#allocation2 + $0x8] sm:$0xff]
    %v53 = vld [vmem:[#allocation5] sm:$0xff]
    %v54 = vld [vmem:[#allocation5 + $0x8] sm:$0xff]
    %v55 = vmul.f32 %v51, 0.5
    %v56 = vmul.f32 %v52, 0.5
    %v57 = vtanh.pop %v55
    %v58 = vtanh.pop %v56
    %v59 = vmul.f32 %v57, 0.5
    %v60 = vmul.f32 %v58, 0.5
    %v61 = vadd.f32 %v59, 0.5
    %v62 = vadd.f32 %v60, 0.5
    %v63 = vld [vmem:[#allocation7] sm:$0xff]
    %v64 = vmul.f32 %v61, %v53
    %v65 = vmul.f32 %v62, %v54
    %v66 = vadd.f32 %v64, %v65
    %v67 = vadd.f32 %v63, %v66
    %68 = vst [vmem:[#allocation7] sm:$0xff] %v67
    %s69 = scalar_lea.vmem [#allocation7], 8
    %v70 = vld [vmem:[%s69] sm:$0xff]
    %v71 = vadd.f32 %v61, %v62
    %v72 = vadd.f32 %v70, %v71
    %73 = vst [vmem:[%s69] sm:$0xff] %v72
    %s74 = scalar_lea.vmem [#allocation7], 16
    %v75 = vld [vmem:[%s74] sm:$0xff]
    %v76 = vadd.f32 %v53, %v54
    %v77 = vadd.f32 %v75, %v76
    %78 = vst [vmem:[%s74] sm:$0xff] %v77
    // Predicated region
    $region22: #{tpu_custom_call.1} parent=1 // pred_check
      _
    $region23: #{tpu_custom_call.1} parent=1 // pred_check_branch
      %80 = sbr.rel (0) target = $region25
    $region24: #{tpu_custom_call.1} parent=1 // pred_region
      %82 = vsyncadd [#allocation4], 0
      %s83 = sshll.u32 [#allocation7], 4
      %s84 = int_to_ptr.vmem [resolvable:$true] %s83
      %s85 = sshll.u32 %s2, 4
      %s86 = int_to_ptr.hbm [resolvable:$true] %s85
      %91 = dma.vmem_to_hbm [thread:$0]  %s84, 384, %s86, [#allocation4], 128, 128, 8
    $region25: #{tpu_custom_call.1} parent=1 // pred_fallthru
      _
    // Predicated region
    $region26: #{tpu_custom_call.1} parent=1 // pred_check
      _
    $region27: #{tpu_custom_call.1} parent=1 // pred_check_branch
      %93 = sbr.rel (0) target = $region29
    $region28: #{tpu_custom_call.1} parent=1 // pred_region
      %95 = dma.done [#allocation4], 384
    $region29: #{tpu_custom_call.1} parent=1 // pred_fallthru
      _
    %96 = vsyncpa [#allocation3], 1
    %97 = vsyncpa [#allocation6], 1
    %98 = vsyncpa [#allocation4], 1

</llo_original>
